<compile_context>
chip_gen: v5e
topology: v5e:2x2
jax: 0.10.0
libtpu: 0.0.40
codegen_flags: <defaults>
</compile_context>

<pallas_src>
import functools

import jax
import jax.numpy as jnp
from jax.experimental import pallas as pl
from jax.experimental.pallas import tpu as pltpu


# ----------------------------------------------------------------------------
# Kernel
# ----------------------------------------------------------------------------
def lora_qkv_kernel(x_ref, wqkv_ref, bqkv_ref, wa_ref, cp_ref, gamma_ref,
                    wd_ref, wb_ref, o_ref):
    x = x_ref[...]                                          # (tm, D) f32 or bf16

    # Main qkv projection: the dominant (tm, D) x (D, 3D) MXU matmul,
    # f32 accumulation, bias added in f32.
    qkv = jnp.dot(x, wqkv_ref[...], preferred_element_type=jnp.float32)
    qkv = qkv + bqkv_ref[...]

    # LoRA "A" projections for q and v, packed along the rank axis -> (tm, 2r).
    a = jnp.dot(x, wa_ref[...], preferred_element_type=jnp.float32)

    # a*CP + gamma*a == a * (CP + gamma): a single f32 VPU multiply.
    s = cp_ref[...] + gamma_ref[...]                        # (1, 2r) f32
    a = a * s

    # FacT "d" maps (block-diagonal over the q/v rank halves), then the LoRA
    # "B" projection whose rows are pre-scattered into the q / v column ranges
    # of the (tm, 3D) output -> residual add is one lane-dense full store.
    d = jnp.dot(a.astype(wd_ref.dtype), wd_ref[...],
                preferred_element_type=jnp.float32)
    delta = jnp.dot(d.astype(wb_ref.dtype), wb_ref[...],
                    preferred_element_type=jnp.float32)

    o_ref[...] = (qkv + delta).astype(o_ref.dtype)


# ----------------------------------------------------------------------------
# Wrapper
# ----------------------------------------------------------------------------
def _pick_tm(m, max_tm=256):
    """Largest legal row tile <= max_tm dividing m ((8,*) layout rule), while
    keeping >=2 parallel grid steps when possible (v7x has 2 TensorCores)."""
    if m <= max_tm:
        half = m // 2
        if m % 2 == 0 and half >= 8 and half % 8 == 0:
            return half
        return m
    for tm in range(max_tm - max_tm % 8, 7, -8):
        if m % tm == 0:
            return tm
    return m  # no aligned divisor: single resident block


def _nbytes(a):
    return a.size * a.dtype.itemsize


def lora_qkv_forward(x, params, *, idx, max_tm=256, mxu_dtype=None,
                     vmem_limit_bytes=48 * 1024 * 1024):
    """x: (B, N, D).  params hold PyTorch-layout weights ((out, in) Linear)."""
    B, N, D = x.shape
    M = B * N
    R = params["a_q_w"].shape[0]          # LoRA / FacT rank (4: gamma is split 4+4)
    out_dtype = x.dtype

    # ---- parameter-only preprocessing (once per call, outside the kernel) ----
    wqkv = params["qkv_w"].T                                    # (D, 3D)
    bqkv = params["qkv_b"].reshape(1, 3 * D).astype(jnp.float32)
    wa = jnp.concatenate([params["a_q_w"].T, params["a_v_w"].T], axis=1)  # (D, 2R)

    # CP = (FacT_c @ FacT_p)[..., idx:idx+2]  -> per-rank-channel scales (1, R, 2)
    CP = (params["fact_c"] @ params["fact_p"])[..., idx:idx + 2]
    cp = jnp.concatenate([CP[:, :, 0], CP[:, :, 1]], axis=1).astype(jnp.float32)
    gamma = params["gamma"].reshape(1, 2 * R).astype(jnp.float32)

    wd = jnp.zeros((2 * R, 2 * R), wqkv.dtype)
    wd = wd.at[:R, :R].set(params["fact_d1_w"].T).at[R:, R:].set(params["fact_d2_w"].T)
    wb = jnp.zeros((2 * R, 3 * D), wqkv.dtype)
    wb = wb.at[:R, :D].set(params["b_q_w"].T).at[R:, 2 * D:].set(params["b_v_w"].T)

    x2 = x.reshape(M, D)
    if mxu_dtype is not None:               # bf16 MXU operands, f32 accumulation
        x2, wqkv, wa, wd, wb = (t.astype(mxu_dtype) for t in (x2, wqkv, wa, wd, wb))

    tm = _pick_tm(M, max_tm)
    assert M % tm == 0
    grid = (M // tm,)

    cost = pl.CostEstimate(
        flops=2 * M * (D * 3 * D + D * 2 * R + 2 * R * 2 * R + 2 * R * 3 * D),
        transcendentals=0,
        bytes_accessed=(_nbytes(x2) + _nbytes(wqkv) + _nbytes(bqkv) + _nbytes(wa)
                        + _nbytes(cp) + _nbytes(gamma) + _nbytes(wd) + _nbytes(wb)
                        + M * 3 * D * jnp.dtype(out_dtype).itemsize),
    )

    const = lambda r, c: pl.BlockSpec((r, c), lambda i: (0, 0))   # resident blocks

    out = pl.pallas_call(
        lora_qkv_kernel,
        out_shape=jax.ShapeDtypeStruct((M, 3 * D), out_dtype),
        grid_spec=pltpu.PrefetchScalarGridSpec(
            num_scalar_prefetch=0,
            grid=grid,
            in_specs=[
                pl.BlockSpec((tm, D), lambda i: (i, 0)),   # x row tile
                const(D, 3 * D),                           # w_qkv
                const(1, 3 * D),                           # b_qkv
                const(D, 2 * R),                           # [a_q | a_v]
                const(1, 2 * R),                           # CP (q-col, v-col)
                const(1, 2 * R),                           # gamma
                const(2 * R, 2 * R),                       # block-diag d maps
                const(2 * R, 3 * D),                       # scattered B maps
            ],
            out_specs=pl.BlockSpec((tm, 3 * D), lambda i: (i, 0)),
        ),
        compiler_params=pltpu.CompilerParams(
            dimension_semantics=("parallel",),
            vmem_limit_bytes=vmem_limit_bytes),
        cost_estimate=cost,
    )(x2, wqkv, bqkv, wa, cp, gamma, wd, wb)

    return out.reshape(B, N, 3 * D)


# ----------------------------------------------------------------------------
# Pure-JAX reference (direct transliteration of the PyTorch forward)
# ----------------------------------------------------------------------------
def lora_qkv_reference(x, params, *, idx):
    D = params["qkv_w"].shape[1]
    R = params["a_q_w"].shape[0]
    qkv = x @ params["qkv_w"].T + params["qkv_b"]
    CP = (params["fact_c"] @ params["fact_p"])[..., idx:idx + 2]
    aq = x @ params["a_q_w"].T
    av = x @ params["a_v_w"].T
    tq = aq * CP[:, :, 0] + params["gamma"][:R] * aq
    tv = av * CP[:, :, 1] + params["gamma"][-R:] * av
    new_q = (tq @ params["fact_d1_w"].T) @ params["b_q_w"].T
    new_v = (tv @ params["fact_d2_w"].T) @ params["b_v_w"].T
    qkv = qkv.at[..., :D].add(new_q)
    qkv = qkv.at[..., -D:].add(new_v)
    return qkv


def _rel_err(a, b):
    return float(jnp.max(jnp.abs(a.astype(jnp.float32) - b))
                 / (jnp.max(jnp.abs(b)) + 1e-12))


# ----------------------------------------------------------------------------
# Demo / self-test
# ----------------------------------------------------------------------------
if __name__ == "__main__":
    # Small shapes consistent with the module: rank r=4 (gamma has 8 entries,
    # split 4 / 4), dim D=32, batch=2, seq=8, idx slices the FacT_p column axis.
    B, N, D, R, S, T, idx = 2, 8, 32, 4, 8, 4, 1
    key = jax.random.PRNGKey(0)
    ks = jax.random.split(key, 11)

    x = jax.random.normal(ks[0], (B, N, D), jnp.float32)

    # Deterministic params (PyTorch Linear layout: weight is (out, in)).
    # LoRA "B" weights are random (not the usual zero init) so the LoRA path
    # is actually exercised by the check.
    # TODO(synk): FacT_d1/FacT_d2 are annotated nn.Parameter in the PyTorch
    # module yet called as modules; they are modeled here as bias-free
    # rank->rank linear maps.
    params = {
        "qkv_w": jax.random.normal(ks[1], (3 * D, D), jnp.float32) * 0.05,
        "qkv_b": jax.random.normal(ks[2], (3 * D,), jnp.float32) * 0.02,
        "a_q_w": jax.random.normal(ks[3], (R, D), jnp.float32) * 0.1,
        "b_q_w": jax.random.normal(ks[4], (D, R), jnp.float32) * 0.2,
        "a_v_w": jax.random.normal(ks[5], (R, D), jnp.float32) * 0.1,
        "b_v_w": jax.random.normal(ks[6], (D, R), jnp.float32) * 0.2,
        "fact_c": jax.random.normal(ks[7], (1, R, S), jnp.float32) * 0.2,
        "fact_p": jax.random.normal(ks[8], (S, T), jnp.float32) * 0.2,
        "fact_d1_w": jax.random.normal(ks[9], (R, R), jnp.float32) * 0.2,
        "fact_d2_w": jax.random.normal(ks[10], (R, R), jnp.float32) * 0.2,
        "gamma": jnp.ones((2 * R,), jnp.float32),   # layer_scale_init_value * ones(8)
    }

    ref = lora_qkv_reference(x, params, idx=idx)

    # f32 path
    out = jax.block_until_ready(lora_qkv_forward(x, params, idx=idx))
    assert out.shape == (B, N, 3 * D)
    err = _rel_err(out, ref)
    assert err < 1e-2, f"f32 kernel mismatch vs reference: rel_err={err}"

    # bf16 MXU-operand path (f32 accumulation), looser tolerance
    out_bf16 = jax.block_until_ready(
        lora_qkv_forward(x, params, idx=idx, mxu_dtype=jnp.bfloat16))
    err_bf16 = _rel_err(out_bf16, ref)
    assert err_bf16 < 5e-2, f"bf16 kernel mismatch vs reference: rel_err={err_bf16}"

    print("KERNEL_OK")
</pallas_src>

<mosaic_0001>
module attributes {stable_mosaic.version = 11 : i64} {
  func.func @lora_qkv_kernel(%arg0: i32, %arg1: memref<8x32xf32, #tpu.memory_space<vmem>>, %arg2: memref<32x96xf32, #tpu.memory_space<vmem>>, %arg3: memref<1x96xf32, #tpu.memory_space<vmem>>, %arg4: memref<32x8xf32, #tpu.memory_space<vmem>>, %arg5: memref<1x8xf32, #tpu.memory_space<vmem>>, %arg6: memref<1x8xf32, #tpu.memory_space<vmem>>, %arg7: memref<8x8xf32, #tpu.memory_space<vmem>>, %arg8: memref<8x96xf32, #tpu.memory_space<vmem>>, %arg9: memref<8x96xf32, #tpu.memory_space<vmem>>) attributes {dimension_semantics = [#tpu.dimension_semantics<parallel>], iteration_bounds = array<i64: 2>, scalar_prefetch = 0 : i64, scratch_operands = 0 : i64, tpu.core_type = #tpu.core_type<tc>, window_params = [{transform_indices = @transform_0, window_bounds = array<i64: 8, 32>}, {pipeline_mode = #tpu.pipeline_mode<synchronous>, transform_indices = @transform_1, window_bounds = array<i64: 32, 96>}, {pipeline_mode = #tpu.pipeline_mode<synchronous>, transform_indices = @transform_2, window_bounds = array<i64: 1, 96>}, {pipeline_mode = #tpu.pipeline_mode<synchronous>, transform_indices = @transform_3, window_bounds = array<i64: 32, 8>}, {pipeline_mode = #tpu.pipeline_mode<synchronous>, transform_indices = @transform_4, window_bounds = array<i64: 1, 8>}, {pipeline_mode = #tpu.pipeline_mode<synchronous>, transform_indices = @transform_5, window_bounds = array<i64: 1, 8>}, {pipeline_mode = #tpu.pipeline_mode<synchronous>, transform_indices = @transform_6, window_bounds = array<i64: 8, 8>}, {pipeline_mode = #tpu.pipeline_mode<synchronous>, transform_indices = @transform_7, window_bounds = array<i64: 8, 96>}, {transform_indices = @transform_8, window_bounds = array<i64: 8, 96>}]} {
    %c0 = arith.constant 0 : index
    %c0_0 = arith.constant 0 : index
    %0 = vector.load %arg1[%c0, %c0_0] : memref<8x32xf32, #tpu.memory_space<vmem>>, vector<8x32xf32>
    %c0_1 = arith.constant 0 : index
    %c0_2 = arith.constant 0 : index
    %1 = vector.load %arg2[%c0_1, %c0_2] : memref<32x96xf32, #tpu.memory_space<vmem>>, vector<32x96xf32>
    %cst = arith.constant dense<0.000000e+00> : vector<8x96xf32>
    %2 = tpu.matmul %0, %1, %cst {dimension_numbers = #tpu.dot_dimension_numbers<[1], [0], [0], [1], [0, 0, 1, 1], [], []>} : vector<8x32xf32>, vector<32x96xf32>, vector<8x96xf32> -> vector<8x96xf32>
    %c0_3 = arith.constant 0 : index
    %c0_4 = arith.constant 0 : index
    %3 = vector.load %arg3[%c0_3, %c0_4] : memref<1x96xf32, #tpu.memory_space<vmem>>, vector<1x96xf32>
    %4 = vector.broadcast %3 : vector<1x96xf32> to vector<8x96xf32>
    %5 = arith.addf %2, %4 : vector<8x96xf32>
    %c0_5 = arith.constant 0 : index
    %c0_6 = arith.constant 0 : index
    %6 = vector.load %arg4[%c0_5, %c0_6] : memref<32x8xf32, #tpu.memory_space<vmem>>, vector<32x8xf32>
    %cst_7 = arith.constant dense<0.000000e+00> : vector<8x8xf32>
    %7 = tpu.matmul %0, %6, %cst_7 {dimension_numbers = #tpu.dot_dimension_numbers<[1], [0], [0], [1], [0, 0, 1, 1], [], []>} : vector<8x32xf32>, vector<32x8xf32>, vector<8x8xf32> -> vector<8x8xf32>
    %c0_8 = arith.constant 0 : index
    %c0_9 = arith.constant 0 : index
    %8 = vector.load %arg5[%c0_8, %c0_9] : memref<1x8xf32, #tpu.memory_space<vmem>>, vector<1x8xf32>
    %c0_10 = arith.constant 0 : index
    %c0_11 = arith.constant 0 : index
    %9 = vector.load %arg6[%c0_10, %c0_11] : memref<1x8xf32, #tpu.memory_space<vmem>>, vector<1x8xf32>
    %10 = arith.addf %8, %9 : vector<1x8xf32>
    %11 = vector.broadcast %10 : vector<1x8xf32> to vector<8x8xf32>
    %12 = arith.mulf %7, %11 : vector<8x8xf32>
    %c0_12 = arith.constant 0 : index
    %c0_13 = arith.constant 0 : index
    %13 = vector.load %arg7[%c0_12, %c0_13] : memref<8x8xf32, #tpu.memory_space<vmem>>, vector<8x8xf32>
    %cst_14 = arith.constant dense<0.000000e+00> : vector<8x8xf32>
    %14 = tpu.matmul %12, %13, %cst_14 {dimension_numbers = #tpu.dot_dimension_numbers<[1], [0], [0], [1], [0, 0, 1, 1], [], []>} : vector<8x8xf32>, vector<8x8xf32>, vector<8x8xf32> -> vector<8x8xf32>
    %c0_15 = arith.constant 0 : index
    %c0_16 = arith.constant 0 : index
    %15 = vector.load %arg8[%c0_15, %c0_16] : memref<8x96xf32, #tpu.memory_space<vmem>>, vector<8x96xf32>
    %cst_17 = arith.constant dense<0.000000e+00> : vector<8x96xf32>
    %16 = tpu.matmul %14, %15, %cst_17 {dimension_numbers = #tpu.dot_dimension_numbers<[1], [0], [0], [1], [0, 0, 1, 1], [], []>} : vector<8x8xf32>, vector<8x96xf32>, vector<8x96xf32> -> vector<8x96xf32>
    %17 = arith.addf %5, %16 : vector<8x96xf32>
    %c0_18 = arith.constant 0 : index
    %c0_19 = arith.constant 0 : index
    %18 = vector.load %arg9[%c0_18, %c0_19] : memref<8x96xf32, #tpu.memory_space<vmem>>, vector<8x96xf32>
    tpu.vector_store %arg9[%c0_18, %c0_19], %17 {strides = array<i32>} : memref<8x96xf32, #tpu.memory_space<vmem>>, vector<8x96xf32>,
    return
  }
  func.func @transform_0(%arg0: i32) -> (i32, i32) {
    %c0_i32 = arith.constant 0 : i32
    %c0_i32_0 = arith.constant 0 : i32
    return %arg0, %c0_i32 : i32, i32
  }
  func.func @transform_1(%arg0: i32) -> (i32, i32) {
    %c0_i32 = arith.constant 0 : i32
    %c0_i32_0 = arith.constant 0 : i32
    %c0_i32_1 = arith.constant 0 : i32
    return %c0_i32, %c0_i32_0 : i32, i32
  }
  func.func @transform_2(%arg0: i32) -> (i32, i32) {
    %c0_i32 = arith.constant 0 : i32
    %c0_i32_0 = arith.constant 0 : i32
    %c0_i32_1 = arith.constant 0 : i32
    return %c0_i32, %c0_i32_0 : i32, i32
  }
  func.func @transform_3(%arg0: i32) -> (i32, i32) {
    %c0_i32 = arith.constant 0 : i32
    %c0_i32_0 = arith.constant 0 : i32
    %c0_i32_1 = arith.constant 0 : i32
    return %c0_i32, %c0_i32_0 : i32, i32
  }
  func.func @transform_4(%arg0: i32) -> (i32, i32) {
    %c0_i32 = arith.constant 0 : i32
    %c0_i32_0 = arith.constant 0 : i32
    %c0_i32_1 = arith.constant 0 : i32
    return %c0_i32, %c0_i32_0 : i32, i32
  }
  func.func @transform_5(%arg0: i32) -> (i32, i32) {
    %c0_i32 = arith.constant 0 : i32
    %c0_i32_0 = arith.constant 0 : i32
    %c0_i32_1 = arith.constant 0 : i32
    return %c0_i32, %c0_i32_0 : i32, i32
  }
  func.func @transform_6(%arg0: i32) -> (i32, i32) {
    %c0_i32 = arith.constant 0 : i32
    %c0_i32_0 = arith.constant 0 : i32
    %c0_i32_1 = arith.constant 0 : i32
    return %c0_i32, %c0_i32_0 : i32, i32
  }
  func.func @transform_7(%arg0: i32) -> (i32, i32) {
    %c0_i32 = arith.constant 0 : i32
    %c0_i32_0 = arith.constant 0 : i32
    %c0_i32_1 = arith.constant 0 : i32
    return %c0_i32, %c0_i32_0 : i32, i32
  }
  func.func @transform_8(%arg0: i32) -> (i32, i32) {
    %c0_i32 = arith.constant 0 : i32
    %c0_i32_0 = arith.constant 0 : i32
    return %arg0, %c0_i32 : i32, i32
  }
}

</mosaic_0001>

<llo_original>
// kernel: tpu_custom_call.1
$region0: #{tpu_custom_call.1}
  #allocation0 [shape = 'u32[]', space=smem, size = 0x4, offset = 0x4, fixed_abs, tag = 'smem constant byte address 0x4 - core index']
  #allocation1 [shape = 'u32[72,128]{1,0:T(1,128)}', space=vmem, size = 0x9000, scoped, tag = 'internal scratch']
  %s0 = inlined_call_operand.hbm [shape: f32[16,32], index: 0, kind: input, shape index: {}]
  %s1 = inlined_call_operand.vmem [shape: f32[32,96], index: 1, kind: input, shape index: {}]
  %s2 = inlined_call_operand.vmem [shape: f32[1,96], index: 2, kind: input, shape index: {}]
  %s3 = inlined_call_operand.vmem [shape: f32[32,8], index: 3, kind: input, shape index: {}]
  %s4 = inlined_call_operand.vmem [shape: f32[1,8], index: 4, kind: input, shape index: {}]
  %s5 = inlined_call_operand.vmem [shape: f32[1,8], index: 5, kind: input, shape index: {}]
  %s6 = inlined_call_operand.vmem [shape: f32[8,8], index: 6, kind: input, shape index: {}]
  %s7 = inlined_call_operand.hbm [shape: f32[8,96], index: 7, kind: input, shape index: {}]
  %s8 = inlined_call_operand.hbm [shape: f32[16,96], index: 8, kind: output, shape index: {}]
  %s9 = sld [smem:[#allocation0]]
  $region73: #{tpu_custom_call.1} parent=0
    _
  %s11 = ssub.s32 1, %s9
  %s12 = scalar_select 0, %s11, %s9
  $region1: #{tpu_custom_call.1} parent=0
    #allocation2 [shape = 'u8[8192]{0}', space=vmem, size = 0x2000, scoped, tag = 'input window, operand 0']
    #allocation3 [shape = 's32[2]{0}', space=sflag, size = 0x8, scoped, tag = 'scoped memory for tpu_custom_call.1']
    #allocation4 [shape = 's32[2]{0}', space=sflag, size = 0x8, scoped, tag = 'scoped memory for tpu_custom_call.1']
    #allocation5 [shape = 'u8[4096]{0}', space=vmem, size = 0x1000, scoped, tag = 'input window, operand 7, single buffered']
    #allocation6 [shape = 's32[1]{0}', space=sflag, size = 0x4, scoped, tag = 'scoped memory for tpu_custom_call.1']
    #allocation7 [shape = 'u8[8192]{0}', space=vmem, size = 0x2000, scoped, tag = 'output window, operand 0']
    %13 = vsyncpa [#allocation3], 0
    %s14 = scalar_lea.sflag [#allocation3], 1
    %15 = vsyncpa %s14, 0
    %16 = vsyncpa [#allocation6], 0
    %17 = vsyncpa [#allocation4], 0
    %s18 = scalar_lea.sflag [#allocation4], 1
    %19 = vsyncpa %s18, 0
    loop: start=0, step=1, limit=4
    $region2: #{tpu_custom_call.1} parent=1 // loop_pre_header
      _
    $region3: #{tpu_custom_call.1} parent=1 // loop_header
      %s21 = sphi 0, %s25
      %p22 = scmp.ge.s32.totalorder %s21, 4
      %s31 = sphi 0, %s33
      %s34 = sphi 0, %s31
      %s35 = sphi 0, %s34
      %s51 = sphi 0, %s35
      %s55 = sphi 0, %s55
      %s57 = sphi 0, %s55
      %s58 = sphi 0, %s57
      %s72 = sphi 0, %s58
      %s76 = sphi 0, %s76
      %s78 = sphi 0, %s76
      %s79 = sphi 0, %s78
      %s93 = sphi 0, %s79
      %s97 = sphi 0, %s97
      %s99 = sphi 0, %s97
      %s100 = sphi 0, %s99
      %s114 = sphi 0, %s100
      %s118 = sphi 0, %s118
      %s120 = sphi 0, %s118
      %s121 = sphi 0, %s120
      %s135 = sphi 0, %s121
      %s139 = sphi 0, %s139
      %s141 = sphi 0, %s139
      %s142 = sphi 0, %s141
      %s156 = sphi 0, %s142
      %s160 = sphi 0, %s160
      %s162 = sphi 0, %s160
      %s163 = sphi 0, %s162
      %s177 = sphi 0, %s163
      %s181 = sphi 0, %s181
      %s183 = sphi 0, %s181
      %s184 = sphi 0, %s183
      %s198 = sphi 0, %s184
      %s204 = sphi 0, %s206
      %s207 = sphi 0, %s204
      %s208 = sphi 0, %s207
      %s224 = sphi 0, %s208
    $region4: #{tpu_custom_call.1} parent=1 // loop_header_branch
      %24 = sbr.rel (%p22) target = $region8
    $region5: #{tpu_custom_call.1} parent=1 // loop_body
      %s26 = ssub.s32 %s21, 1
      %s27 = ssub.s32 %s21, 2
      %s28 = sadd.s32 %s21, 1
      %s29 = ssub.s32 %s21, %s28
      %p30 = scmp.eq.s32.totalorder %s29, 0
      %s32 = sadd.s32 %s31, 1
      %s33 = scalar_select %p30, %s31, %s32
      %p36 = pneg %p30
      %p37 = scmp.eq.s32.totalorder %s21, 1
      %p38 = por %p36, %p37
      %p39 = scmp.ne.s32.totalorder %s31, %s34
      %p40 = scmp.eq.s32.totalorder %s21, 0
      %p41 = por %p39, %p40
      %p42 = scmp.ne.s32.totalorder %s31, %s34
      %p43 = scmp.eq.s32.totalorder %s26, 1
      %p44 = por %p42, %p43
      %p45 = scmp.ne.s32.totalorder %s34, %s35
      %p46 = scmp.eq.s32.totalorder %s26, 0
      %p47 = por %p45, %p46
      %p48 = scmp.ne.s32.totalorder %s34, %s35
      %p49 = scmp.eq.s32.totalorder %s27, 1
      %p50 = por %p48, %p49
      %p52 = scmp.ne.s32.totalorder %s35, %s51
      %p53 = scmp.eq.s32.totalorder %s27, 0
      %p54 = por %p52, %p53
      %s56 = sadd.s32 %s55, 1
      %p59 = scmp.eq.s32.totalorder %s21, 1
      %p60 = scmp.ne.s32.totalorder %s55, %s57
      %p61 = scmp.eq.s32.totalorder %s21, 0
      %p62 = por %p60, %p61
      %p63 = scmp.ne.s32.totalorder %s55, %s57
      %p64 = scmp.eq.s32.totalorder %s26, 1
      %p65 = por %p63, %p64
      %p66 = scmp.ne.s32.totalorder %s57, %s58
      %p67 = scmp.eq.s32.totalorder %s26, 0
      %p68 = por %p66, %p67
      %p69 = scmp.ne.s32.totalorder %s57, %s58
      %p70 = scmp.eq.s32.totalorder %s27, 1
      %p71 = por %p69, %p70
      %p73 = scmp.ne.s32.totalorder %s58, %s72
      %p74 = scmp.eq.s32.totalorder %s27, 0
      %p75 = por %p73, %p74
      %s77 = sadd.s32 %s76, 1
      %p80 = scmp.eq.s32.totalorder %s21, 1
      %p81 = scmp.ne.s32.totalorder %s76, %s78
      %p82 = scmp.eq.s32.totalorder %s21, 0
      %p83 = por %p81, %p82
      %p84 = scmp.ne.s32.totalorder %s76, %s78
      %p85 = scmp.eq.s32.totalorder %s26, 1
      %p86 = por %p84, %p85
      %p87 = scmp.ne.s32.totalorder %s78, %s79
      %p88 = scmp.eq.s32.totalorder %s26, 0
      %p89 = por %p87, %p88
      %p90 = scmp.ne.s32.totalorder %s78, %s79
      %p91 = scmp.eq.s32.totalorder %s27, 1
      %p92 = por %p90, %p91
      %p94 = scmp.ne.s32.totalorder %s79, %s93
      %p95 = scmp.eq.s32.totalorder %s27, 0
      %p96 = por %p94, %p95
      %s98 = sadd.s32 %s97, 1
      %p101 = scmp.eq.s32.totalorder %s21, 1
      %p102 = scmp.ne.s32.totalorder %s97, %s99
      %p103 = scmp.eq.s32.totalorder %s21, 0
      %p104 = por %p102, %p103
      %p105 = scmp.ne.s32.totalorder %s97, %s99
      %p106 = scmp.eq.s32.totalorder %s26, 1
      %p107 = por %p105, %p106
      %p108 = scmp.ne.s32.totalorder %s99, %s100
      %p109 = scmp.eq.s32.totalorder %s26, 0
      %p110 = por %p108, %p109
      %p111 = scmp.ne.s32.totalorder %s99, %s100
      %p112 = scmp.eq.s32.totalorder %s27, 1
      %p113 = por %p111, %p112
      %p115 = scmp.ne.s32.totalorder %s100, %s114
      %p116 = scmp.eq.s32.totalorder %s27, 0
      %p117 = por %p115, %p116
      %s119 = sadd.s32 %s118, 1
      %p122 = scmp.eq.s32.totalorder %s21, 1
      %p123 = scmp.ne.s32.totalorder %s118, %s120
      %p124 = scmp.eq.s32.totalorder %s21, 0
      %p125 = por %p123, %p124
      %p126 = scmp.ne.s32.totalorder %s118, %s120
      %p127 = scmp.eq.s32.totalorder %s26, 1
      %p128 = por %p126, %p127
      %p129 = scmp.ne.s32.totalorder %s120, %s121
      %p130 = scmp.eq.s32.totalorder %s26, 0
      %p131 = por %p129, %p130
      %p132 = scmp.ne.s32.totalorder %s120, %s121
      %p133 = scmp.eq.s32.totalorder %s27, 1
      %p134 = por %p132, %p133
      %p136 = scmp.ne.s32.totalorder %s121, %s135
      %p137 = scmp.eq.s32.totalorder %s27, 0
      %p138 = por %p136, %p137
      %s140 = sadd.s32 %s139, 1
      %p143 = scmp.eq.s32.totalorder %s21, 1
      %p144 = scmp.ne.s32.totalorder %s139, %s141
      %p145 = scmp.eq.s32.totalorder %s21, 0
      %p146 = por %p144, %p145
      %p147 = scmp.ne.s32.totalorder %s139, %s141
      %p148 = scmp.eq.s32.totalorder %s26, 1
      %p149 = por %p147, %p148
      %p150 = scmp.ne.s32.totalorder %s141, %s142
      %p151 = scmp.eq.s32.totalorder %s26, 0
      %p152 = por %p150, %p151
      %p153 = scmp.ne.s32.totalorder %s141, %s142
      %p154 = scmp.eq.s32.totalorder %s27, 1
      %p155 = por %p153, %p154
      %p157 = scmp.ne.s32.totalorder %s142, %s156
      %p158 = scmp.eq.s32.totalorder %s27, 0
      %p159 = por %p157, %p158
      %s161 = sadd.s32 %s160, 1
      %p164 = scmp.eq.s32.totalorder %s21, 1
      %p165 = scmp.ne.s32.totalorder %s160, %s162
      %p166 = scmp.eq.s32.totalorder %s21, 0
      %p167 = por %p165, %p166
      %p168 = scmp.ne.s32.totalorder %s160, %s162
      %p169 = scmp.eq.s32.totalorder %s26, 1
      %p170 = por %p168, %p169
      %p171 = scmp.ne.s32.totalorder %s162, %s163
      %p172 = scmp.eq.s32.totalorder %s26, 0
      %p173 = por %p171, %p172
      %p174 = scmp.ne.s32.totalorder %s162, %s163
      %p175 = scmp.eq.s32.totalorder %s27, 1
      %p176 = por %p174, %p175
      %p178 = scmp.ne.s32.totalorder %s163, %s177
      %p179 = scmp.eq.s32.totalorder %s27, 0
      %p180 = por %p178, %p179
      %s182 = sadd.s32 %s181, 1
      %p185 = scmp.eq.s32.totalorder %s21, 1
      %p186 = scmp.ne.s32.totalorder %s181, %s183
      %p187 = scmp.eq.s32.totalorder %s21, 0
      %p188 = por %p186, %p187
      %p189 = scmp.ne.s32.totalorder %s181, %s183
      %p190 = scmp.eq.s32.totalorder %s26, 1
      %p191 = por %p189, %p190
      %p192 = scmp.ne.s32.totalorder %s183, %s184
      %p193 = scmp.eq.s32.totalorder %s26, 0
      %p194 = por %p192, %p193
      %p195 = scmp.ne.s32.totalorder %s183, %s184
      %p196 = scmp.eq.s32.totalorder %s27, 1
      %p197 = por %p195, %p196
      %p199 = scmp.ne.s32.totalorder %s184, %s198
      %p200 = scmp.eq.s32.totalorder %s27, 0
      %p201 = por %p199, %p200
      %s202 = ssub.s32 %s21, %s28
      %p203 = scmp.eq.s32.totalorder %s202, 0
      %s205 = sadd.s32 %s204, 1
      %s206 = scalar_select %p203, %s204, %s205
      %p209 = pneg %p203
      %p210 = scmp.eq.s32.totalorder %s21, 1
      %p211 = por %p209, %p210
      %p212 = scmp.ne.s32.totalorder %s204, %s207
      %p213 = scmp.eq.s32.totalorder %s21, 0
      %p214 = por %p212, %p213
      %p215 = scmp.ne.s32.totalorder %s204, %s207
      %p216 = scmp.eq.s32.totalorder %s26, 1
      %p217 = por %p215, %p216
      %p218 = scmp.ne.s32.totalorder %s207, %s208
      %p219 = scmp.eq.s32.totalorder %s26, 0
      %p220 = por %p218, %p219
      %p221 = scmp.ne.s32.totalorder %s207, %s208
      %p222 = scmp.eq.s32.totalorder %s27, 1
      %p223 = por %p221, %p222
      %p225 = scmp.ne.s32.totalorder %s208, %s224
      %p226 = scmp.eq.s32.totalorder %s27, 0
      %p227 = por %p225, %p226
      %p228 = scmp.le.s32.totalorder 1, %s21
      %p229 = scmp.lt.s32.totalorder %s21, 3
      %p230 = pnand %p228, %p229
      %p231 = pneg %p230
      // Predicated region
      $region9: #{tpu_custom_call.1} parent=5 // pred_check
        _
      $region10: #{tpu_custom_call.1} parent=5 // pred_check_branch
        %233 = sbr.rel (%p230) target = $region12
      $region11: #{tpu_custom_call.1} parent=5 // pred_region
        %s234 = ssub.s32 %s21, 1
        // Predicated region
        $region13: #{tpu_custom_call.1} parent=11 // pred_check
          %p235 = pneg %p68
        $region14: #{tpu_custom_call.1} parent=11 // pred_check_branch
          %237 = sbr.rel (%p235) target = $region16
        $region15: #{tpu_custom_call.1} parent=11 // pred_region
          _
        $region16: #{tpu_custom_call.1} parent=11 // pred_fallthru
          _
        // Predicated region
        $region17: #{tpu_custom_call.1} parent=11 // pred_check
          %p238 = pneg %p89
        $region18: #{tpu_custom_call.1} parent=11 // pred_check_branch
          %240 = sbr.rel (%p238) target = $region20
        $region19: #{tpu_custom_call.1} parent=11 // pred_region
          _
        $region20: #{tpu_custom_call.1} parent=11 // pred_fallthru
          _
        // Predicated region
        $region21: #{tpu_custom_call.1} parent=11 // pred_check
          %p241 = pneg %p110
        $region22: #{tpu_custom_call.1} parent=11 // pred_check_branch
          %243 = sbr.rel (%p241) target = $region24
        $region23: #{tpu_custom_call.1} parent=11 // pred_region
          _
        $region24: #{tpu_custom_call.1} parent=11 // pred_fallthru
          _
        // Predicated region
        $region25: #{tpu_custom_call.1} parent=11 // pred_check
          %p244 = pneg %p131
        $region26: #{tpu_custom_call.1} parent=11 // pred_check_branch
          %246 = sbr.rel (%p244) target = $region28
        $region27: #{tpu_custom_call.1} parent=11 // pred_region
          _
        $region28: #{tpu_custom_call.1} parent=11 // pred_fallthru
          _
        // Predicated region
        $region29: #{tpu_custom_call.1} parent=11 // pred_check
          %p247 = pneg %p152
        $region30: #{tpu_custom_call.1} parent=11 // pred_check_branch
          %249 = sbr.rel (%p247) target = $region32
        $region31: #{tpu_custom_call.1} parent=11 // pred_region
          _
        $region32: #{tpu_custom_call.1} parent=11 // pred_fallthru
          _
        // Predicated region
        $region33: #{tpu_custom_call.1} parent=11 // pred_check
          %p250 = pneg %p173
        $region34: #{tpu_custom_call.1} parent=11 // pred_check_branch
          %252 = sbr.rel (%p250) target = $region36
        $region35: #{tpu_custom_call.1} parent=11 // pred_region
          _
        $region36: #{tpu_custom_call.1} parent=11 // pred_fallthru
          _
        // Predicated region
        $region37: #{tpu_custom_call.1} parent=11 // pred_check
          %p253 = pneg %p194
        $region38: #{tpu_custom_call.1} parent=11 // pred_check_branch
          %255 = sbr.rel (%p253) target = $region40
        $region39: #{tpu_custom_call.1} parent=11 // pred_region
          %257 = vsyncadd [#allocation6], 0
          %s259 = sshll.u32 %s7, 4
          %s260 = int_to_ptr.hbm [resolvable:$true] %s259
          %s261 = sshll.u32 [#allocation5], 4
          %s262 = int_to_ptr.vmem [resolvable:$true] %s261
          %264 = dma.hbm_to_vmem [thread:$0]  %s260, 128, %s262, [#allocation6]
        $region40: #{tpu_custom_call.1} parent=11 // pred_fallthru
          _
      $region12: #{tpu_custom_call.1} parent=5 // pred_fallthru
        _
      %p265 = scmp.lt.s32.totalorder %s21, 2
      // Predicated region
      $region41: #{tpu_custom_call.1} parent=5 // pred_check
        %p266 = pneg %p265
      $region42: #{tpu_custom_call.1} parent=5 // pred_check_branch
        %268 = sbr.rel (%p266) target = $region44
      $region43: #{tpu_custom_call.1} parent=5 // pred_region
        // Predicated region
        $region45: #{tpu_custom_call.1} parent=43 // pred_check
          %p269 = pneg %p41
        $region46: #{tpu_custom_call.1} parent=43 // pred_check_branch
          %271 = sbr.rel (%p269) target = $region48
        $region47: #{tpu_custom_call.1} parent=43 // pred_region
          %s272 = sand.u32 %s31, 1
          %s273 = scalar_lea.sflag [#allocation3], %s272
          %s274 = sand.u32 %s31, 1
          %s275 = smul.addr %s274, 8
          %s276 = scalar_lea.vmem [#allocation2], %s275
          %278 = vsyncadd %s273, 0
          %s279 = smul.addr %s21, 8
          %s280 = scalar_lea.hbm %s0, %s279
          %s282 = sshll.u32 %s280, 4
          %s283 = int_to_ptr.hbm [resolvable:$true] %s282
          %s284 = sshll.u32 %s276, 4
          %s285 = int_to_ptr.vmem [resolvable:$true] %s284
          %287 = dma.hbm_to_vmem [thread:$0]  %s283, 128, %s285, %s273
        $region48: #{tpu_custom_call.1} parent=43 // pred_fallthru
          _
      $region44: #{tpu_custom_call.1} parent=5 // pred_fallthru
        _
      %p288 = scmp.le.s32.totalorder 1, %s21
      %p289 = scmp.lt.s32.totalorder %s21, 3
      %p290 = pnand %p288, %p289
      %p291 = pneg %p290
      // Predicated region
      $region49: #{tpu_custom_call.1} parent=5 // pred_check
        _
      $region50: #{tpu_custom_call.1} parent=5 // pred_check_branch
        %293 = sbr.rel (%p290) target = $region52
      $region51: #{tpu_custom_call.1} parent=5 // pred_region
        %s294 = ssub.s32 %s21, 1
        %s295 = sand.u32 %s34, 1
        %s296 = scalar_lea.sflag [#allocation3], %s295
        %s297 = sand.u32 %s34, 1
        %s298 = smul.addr %s297, 8
        %s299 = scalar_lea.vmem [#allocation2], %s298
        // Predicated region
        $region53: #{tpu_custom_call.1} parent=51 // pred_check
          %p300 = pneg %p47
        $region54: #{tpu_custom_call.1} parent=51 // pred_check_branch
          %302 = sbr.rel (%p300) target = $region56
        $region55: #{tpu_custom_call.1} parent=51 // pred_region
          %304 = dma.done %s296, 128
        $region56: #{tpu_custom_call.1} parent=51 // pred_fallthru
          _
        // Predicated region
        $region57: #{tpu_custom_call.1} parent=51 // pred_check
          %p305 = pneg %p194
        $region58: #{tpu_custom_call.1} parent=51 // pred_check_branch
          %307 = sbr.rel (%p305) target = $region60
        $region59: #{tpu_custom_call.1} parent=51 // pred_region
          %309 = dma.done [#allocation6], 128
        $region60: #{tpu_custom_call.1} parent=51 // pred_fallthru
          _
        %s310 = sand.u32 %s34, 1
        %s311 = scalar_lea.sflag [#allocation3], %s310
        %s312 = sand.u32 %s34, 1
        %s313 = smul.addr %s312, 8
        %s314 = scalar_lea.vmem [#allocation2], %s313
        %p315 = pneg %p47
        %p316 = pneg %p44
        %p317 = pneg %p68
        %p318 = pneg %p65
        %p319 = pneg %p89
        %p320 = pneg %p86
        %p321 = pneg %p110
        %p322 = pneg %p107
        %p323 = pneg %p131
        %p324 = pneg %p128
        %p325 = pneg %p152
        %p326 = pneg %p149
        %p327 = pneg %p173
        %p328 = pneg %p170
        %p329 = pneg %p194
        %p330 = pneg %p191
        %p331 = pneg %p220
        %p332 = pneg %p217
        %s333 = sand.u32 %s207, 1
        %s334 = scalar_lea.sflag [#allocation4], %s333
        %s335 = sand.u32 %s207, 1
        %s336 = smul.addr %s335, 8
        %s337 = scalar_lea.vmem [#allocation7], %s336
        %v338 = vld [vmem:[%s299] sm:$0xff]
        %v339 = vld [vmem:[%s1] sm:$0xff]
        %v340 = vld [vmem:[%s1 + $0x8] sm:$0xff]
        %v341 = vld [vmem:[%s1 + $0x10] sm:$0xff]
        %v342 = vld [vmem:[%s1 + $0x18] sm:$0xff]
        %v343 = vld [vmem:[%s2] sm:$0x1]
        %v345 = vperm.slane %v343, 0
        %vm347 = vcmask 261120
        %v349 = vsel %vm347, %v338, 0
        %351 = vmatpush.msra.mxu0 0.0
        %352 = vmatpush.msra.mxu0 0.0
        %353 = vmatpush.msra.mxu0 0.0
        %354 = vmatpush.msra.mxu0 0.0
        %355 = vmatpush.msra.mxu0 0.0
        %356 = vmatpush.msra.mxu0 0.0
        %357 = vmatpush.msra.mxu0 0.0
        %358 = vmatpush.msra.mxu0 0.0
        %359 = vmatpush.msra.mxu0 0.0
        %360 = vmatpush.msra.mxu0 0.0
        %361 = vmatpush.msra.mxu0 0.0
        %362 = vmatpush.msra.mxu0 0.0
        %363 = vmatpush.msra.mxu0 %v342
        %364 = vmatpush.msra.mxu0 %v341
        %365 = vmatpush.msra.mxu0 %v340
        %366 = vmatpush.msra.mxu0 %v339
        %367 = vmatmul.f32.gmra.mxu0 %v349
        %v368 = vpop.f32.mrf.mxu0
        %v369 = vadd.f32 %v345, %v368
        %370 = vdwg.mxu0
        %v371 = vld [vmem:[%s3] sm:$0xff]
        %v372 = vld [vmem:[%s3 + $0x8] sm:$0xff]
        %v373 = vld [vmem:[%s3 + $0x10] sm:$0xff]
        %v374 = vld [vmem:[%s3 + $0x18] sm:$0xff]
        %375 = vmatpush.msra.mxu0 0.0
        %376 = vmatpush.msra.mxu0 0.0
        %377 = vmatpush.msra.mxu0 0.0
        %378 = vmatpush.msra.mxu0 0.0
        %379 = vmatpush.msra.mxu0 0.0
        %380 = vmatpush.msra.mxu0 0.0
        %381 = vmatpush.msra.mxu0 0.0
        %382 = vmatpush.msra.mxu0 0.0
        %383 = vmatpush.msra.mxu0 0.0
        %384 = vmatpush.msra.mxu0 0.0
        %385 = vmatpush.msra.mxu0 0.0
        %386 = vmatpush.msra.mxu0 0.0
        %387 = vmatpush.msra.mxu0 %v374
        %388 = vmatpush.msra.mxu0 %v373
        %389 = vmatpush.msra.mxu0 %v372
        %390 = vmatpush.msra.mxu0 %v371
        %391 = vmatmul.f32.gmra.mxu0 %v349
        %v392 = vpop.f32.mrf.mxu0
        %v393 = vadd.f32 0.0, %v392
        %394 = vdwg.mxu0
        %v395 = vld [vmem:[%s4] sm:$0x1]
        %v396 = vld [vmem:[%s5] sm:$0x1]
        %v397 = vadd.f32 %v395, %v396
        %v399 = vperm.slane %v397, 0
        %v401 = vmul.f32 %v393, %v399
        %v402 = vld [vmem:[%s6] sm:$0xff]
        %vm403 = vcmask 64512
        %v405 = vsel %vm403, %v401, 0
        %407 = vmatpush.msra.mxu0 0.0
        %408 = vmatpush.msra.mxu0 0.0
        %409 = vmatpush.msra.mxu0 0.0
        %410 = vmatpush.msra.mxu0 0.0
        %411 = vmatpush.msra.mxu0 0.0
        %412 = vmatpush.msra.mxu0 0.0
        %413 = vmatpush.msra.mxu0 0.0
        %414 = vmatpush.msra.mxu0 0.0
        %415 = vmatpush.msra.mxu0 0.0
        %416 = vmatpush.msra.mxu0 0.0
        %417 = vmatpush.msra.mxu0 0.0
        %418 = vmatpush.msra.mxu0 0.0
        %419 = vmatpush.msra.mxu0 0.0
        %420 = vmatpush.msra.mxu0 0.0
        %421 = vmatpush.msra.mxu0 0.0
        %422 = vmatpush.msra.mxu0 %v402
        %423 = vmatmul.f32.gmra.mxu0 %v405
        %v424 = vpop.f32.mrf.mxu0
        %v425 = vadd.f32 0.0, %v424
        %426 = vdwg.mxu0
        %v427 = vld [vmem:[#allocation5] sm:$0xff]
        %v429 = vsel %vm403, %v425, 0
        %431 = vmatpush.msra.mxu0 0.0
        %432 = vmatpush.msra.mxu0 0.0
        %433 = vmatpush.msra.mxu0 0.0
        %434 = vmatpush.msra.mxu0 0.0
        %435 = vmatpush.msra.mxu0 0.0
        %436 = vmatpush.msra.mxu0 0.0
        %437 = vmatpush.msra.mxu0 0.0
        %438 = vmatpush.msra.mxu0 0.0
        %439 = vmatpush.msra.mxu0 0.0
        %440 = vmatpush.msra.mxu0 0.0
        %441 = vmatpush.msra.mxu0 0.0
        %442 = vmatpush.msra.mxu0 0.0
        %443 = vmatpush.msra.mxu0 0.0
        %444 = vmatpush.msra.mxu0 0.0
        %445 = vmatpush.msra.mxu0 0.0
        %446 = vmatpush.msra.mxu0 %v427
        %447 = vmatmul.f32.gmra.mxu0 %v429
        %v448 = vpop.f32.mrf.mxu0
        %v449 = vadd.f32 0.0, %v448
        %450 = vdwg.mxu0
        %v451 = vadd.f32 %v369, %v449
        %vm452 = vcmask 785408
        %453 = vst.msk [vmem:[%s337] sm:$0xff] %vm452, %v451
        %s454 = sand.u32 %s207, 1
        %s455 = scalar_lea.sflag [#allocation4], %s454
        %s456 = sand.u32 %s207, 1
        %s457 = smul.addr %s456, 8
        %s458 = scalar_lea.vmem [#allocation7], %s457
        // Predicated region
        $region61: #{tpu_custom_call.1} parent=51 // pred_check
          %p459 = pneg %p217
        $region62: #{tpu_custom_call.1} parent=51 // pred_check_branch
          %461 = sbr.rel (%p459) target = $region64
        $region63: #{tpu_custom_call.1} parent=51 // pred_region
          %463 = vsyncadd %s455, 0
          %s464 = smul.addr %s26, 8
          %s465 = scalar_lea.hbm %s8, %s464
          %s467 = sshll.u32 %s458, 4
          %s468 = int_to_ptr.vmem [resolvable:$true] %s467
          %s469 = sshll.u32 %s465, 4
          %s470 = int_to_ptr.hbm [resolvable:$true] %s469
          %472 = dma.vmem_to_hbm [thread:$0]  %s468, 128, %s470, %s455
        $region64: #{tpu_custom_call.1} parent=51 // pred_fallthru
          _
      $region52: #{tpu_custom_call.1} parent=5 // pred_fallthru
        _
      %p473 = scmp.le.s32.totalorder 2, %s21
      // Predicated region
      $region65: #{tpu_custom_call.1} parent=5 // pred_check
        %p474 = pneg %p473
      $region66: #{tpu_custom_call.1} parent=5 // pred_check_branch
        %476 = sbr.rel (%p474) target = $region68
      $region67: #{tpu_custom_call.1} parent=5 // pred_region
        %s477 = ssub.s32 %s21, 2
        // Predicated region
        $region69: #{tpu_custom_call.1} parent=67 // pred_check
          %p478 = pneg %p223
        $region70: #{tpu_custom_call.1} parent=67 // pred_check_branch
          %480 = sbr.rel (%p478) target = $region72
        $region71: #{tpu_custom_call.1} parent=67 // pred_region
          %s481 = sand.u32 %s208, 1
          %s482 = scalar_lea.sflag [#allocation4], %s481
          %s483 = sand.u32 %s208, 1
          %s484 = smul.addr %s483, 8
          %s485 = scalar_lea.vmem [#allocation7], %s484
          %487 = dma.done %s482, 128
        $region72: #{tpu_custom_call.1} parent=67 // pred_fallthru
          _
      $region68: #{tpu_custom_call.1} parent=5 // pred_fallthru
        _
    $region6: #{tpu_custom_call.1} parent=1 // loop_footer
      %s25 = sadd.s32 1, %s21
    $region7: #{tpu_custom_call.1} parent=1 // loop_footer_branch
      %20 = sbr.rel target = $region3
    $region8: #{tpu_custom_call.1} parent=1 // loop_exit
      _
    %488 = vsyncpa [#allocation3], 1
    %s489 = scalar_lea.sflag [#allocation3], 1
    %490 = vsyncpa %s489, 1
    %491 = vsyncpa [#allocation6], 1
    %492 = vsyncpa [#allocation4], 1
    %s493 = scalar_lea.sflag [#allocation4], 1
    %494 = vsyncpa %s493, 1

</llo_original>
